<compile_context>
chip_gen: v5e
topology: v5e:2x2
jax: 0.10.0
libtpu: 0.0.40
codegen_flags: <defaults>
</compile_context>

<pallas_src>
import functools

import jax
import jax.numpy as jnp
from jax.experimental import pallas as pl
from jax.experimental.pallas import tpu as pltpu


def _mlp_kernel(p_ref, x_ref, o_ref):
    # Packed params, (9, 22) f32:
    #   [:9, 0:4]   W1 (9,4)    [:9, 4:5]    b1 (9,1)
    #   [:6, 5:14]  W2 (6,9)    [:6, 14:15]  b2 (6,1)
    #   [:1, 15:21] W3 (1,6)    [:1, 21:22]  b3 (1,1)
    p = p_ref[...]
    x = x_ref[...]                                   # (4, TB)  batch on lanes

    w1 = p[0:9, 0:4]
    b1 = p[0:9, 4:5]
    w2 = p[0:6, 5:14]
    b2 = p[0:6, 14:15]
    w3 = p[0:1, 15:21]
    b3 = p[0:1, 21:22]

    h1 = jax.nn.sigmoid(
        jnp.dot(w1, x, preferred_element_type=jnp.float32) + b1)    # (9, TB)
    h2 = jax.nn.sigmoid(
        jnp.dot(w2, h1, preferred_element_type=jnp.float32) + b2)   # (6, TB)
    out = jax.nn.sigmoid(
        jnp.dot(w3, h2, preferred_element_type=jnp.float32) + b3)   # (1, TB)

    o_ref[...] = out.astype(o_ref.dtype)


def _pack_params(w1, b1, w2, b2, w3, b3):
    """Pack all weights/biases into one (9, 22) f32 block (single DMA)."""
    p = jnp.zeros((9, 22), jnp.float32)
    p = p.at[0:9, 0:4].set(w1.astype(jnp.float32))
    p = p.at[0:9, 4].set(b1.astype(jnp.float32))
    p = p.at[0:6, 5:14].set(w2.astype(jnp.float32))
    p = p.at[0:6, 14].set(b2.astype(jnp.float32))
    p = p.at[0:1, 15:21].set(w3.astype(jnp.float32))
    p = p.at[0:1, 21].set(b3.astype(jnp.float32))
    return p


@functools.partial(jax.jit, static_argnames=("block_b",))
def dqnetwork_forward(x, w1, b1, w2, b2, w3, b3, *, block_b=512):
    """Forward pass of DQNetwork.

    x:  (B, 4) float32
    w1: (9, 4),  b1: (9,)   -- PyTorch nn.Linear layout (out_features, in_features)
    w2: (6, 9),  b2: (6,)
    w3: (1, 6),  b3: (1,)
    Returns (B, 1) float32.

    block_b: batch tile (lane) width per grid step; raise for very large B
    (and set pltpu.CompilerParams(vmem_limit_bytes=...) if tiles grow big).
    """
    B = x.shape[0]
    n_blocks = pl.cdiv(B, block_b)
    bp = n_blocks * block_b

    # Batch-on-lanes layout (layout plumbing, outside the kernel).
    x_t = x.astype(jnp.float32).T                    # (4, B)
    if bp != B:
        x_t = jnp.pad(x_t, ((0, 0), (0, bp - B)))    # (4, Bp)

    params = _pack_params(w1, b1, w2, b2, w3, b3)    # (9, 22)

    out_t = pl.pallas_call(
        _mlp_kernel,
        out_shape=jax.ShapeDtypeStruct((1, bp), jnp.float32),
        grid=(n_blocks,),
        in_specs=[
            pl.BlockSpec((9, 22), lambda i: (0, 0)),        # params, resident
            pl.BlockSpec((4, block_b), lambda i: (0, i)),   # x tile
        ],
        out_specs=pl.BlockSpec((1, block_b), lambda i: (0, i)),
        compiler_params=pltpu.CompilerParams(
            dimension_semantics=("parallel",),              # megacore sharding on v7x
        ),
    )(params, x_t)

    return out_t.T[:B]                               # (B, 1)


if __name__ == "__main__":
    key = jax.random.PRNGKey(0)
    kx, k1, k2, k3, kb1, kb2, kb3 = jax.random.split(key, 7)

    B = 2000                       # non-multiple of the batch tile -> exercises padding
    state_size, h1_size, h2_size, action_size = 4, 9, 6, 1

    x = jax.random.normal(kx, (B, state_size), jnp.float32)

    def xavier(k, fan_out, fan_in):
        # torch.nn.init.xavier_uniform_ bound: sqrt(6 / (fan_in + fan_out))
        bound = jnp.sqrt(6.0 / (fan_in + fan_out))
        return jax.random.uniform(k, (fan_out, fan_in), jnp.float32, -bound, bound)

    def bias(k, fan_in, fan_out):
        # PyTorch nn.Linear default bias init: U(-1/sqrt(fan_in), 1/sqrt(fan_in))
        bound = 1.0 / jnp.sqrt(float(fan_in))
        return jax.random.uniform(k, (fan_out,), jnp.float32, -bound, bound)

    w1 = xavier(k1, h1_size, state_size)
    b1 = bias(kb1, state_size, h1_size)
    w2 = xavier(k2, h2_size, h1_size)
    b2 = bias(kb2, h1_size, h2_size)
    w3 = xavier(k3, action_size, h2_size)
    b3 = bias(kb3, h2_size, action_size)

    out = dqnetwork_forward(x, w1, b1, w2, b2, w3, b3)
    out = jax.block_until_ready(out)

    # Pure-JAX reference (PyTorch semantics: y = x @ W.T + b).
    h = jax.nn.sigmoid(x @ w1.T + b1)
    h = jax.nn.sigmoid(h @ w2.T + b2)
    ref = jax.nn.sigmoid(h @ w3.T + b3)

    assert out.shape == (B, action_size)
    assert jnp.allclose(out, ref, atol=2e-5, rtol=2e-5)

    print("KERNEL_OK")
</pallas_src>

<mosaic_0001>
module attributes {stable_mosaic.version = 11 : i64} {
  func.func @_mlp_kernel(%arg0: i32, %arg1: memref<9x22xf32, #tpu.memory_space<vmem>>, %arg2: memref<4x512xf32, #tpu.memory_space<vmem>>, %arg3: memref<1x512xf32, #tpu.memory_space<vmem>>) attributes {dimension_semantics = [#tpu.dimension_semantics<parallel>], iteration_bounds = array<i64: 4>, scalar_prefetch = 0 : i64, scratch_operands = 0 : i64, tpu.core_type = #tpu.core_type<tc>, window_params = [{pipeline_mode = #tpu.pipeline_mode<synchronous>, transform_indices = @transform_0, window_bounds = array<i64: 9, 22>}, {transform_indices = @transform_1, window_bounds = array<i64: 4, 512>}, {transform_indices = @transform_2, window_bounds = array<i64: 1, 512>}]} {
    %c0 = arith.constant 0 : index
    %c0_0 = arith.constant 0 : index
    %0 = vector.load %arg1[%c0, %c0_0] : memref<9x22xf32, #tpu.memory_space<vmem>>, vector<9x22xf32>
    %c0_1 = arith.constant 0 : index
    %c0_2 = arith.constant 0 : index
    %1 = vector.load %arg2[%c0_1, %c0_2] : memref<4x512xf32, #tpu.memory_space<vmem>>, vector<4x512xf32>
    %2 = vector.extract_strided_slice %0 {offsets = [0, 0], sizes = [9, 4], strides = [1, 1]} : vector<9x22xf32> to vector<9x4xf32>
    %3 = vector.extract_strided_slice %0 {offsets = [0, 4], sizes = [9, 1], strides = [1, 1]} : vector<9x22xf32> to vector<9x1xf32>
    %4 = vector.extract_strided_slice %0 {offsets = [0, 5], sizes = [6, 9], strides = [1, 1]} : vector<9x22xf32> to vector<6x9xf32>
    %5 = vector.extract_strided_slice %0 {offsets = [0, 14], sizes = [6, 1], strides = [1, 1]} : vector<9x22xf32> to vector<6x1xf32>
    %6 = vector.extract_strided_slice %0 {offsets = [0, 15], sizes = [1, 6], strides = [1, 1]} : vector<9x22xf32> to vector<1x6xf32>
    %7 = vector.extract_strided_slice %0 {offsets = [0, 21], sizes = [1, 1], strides = [1, 1]} : vector<9x22xf32> to vector<1x1xf32>
    %cst = arith.constant dense<0.000000e+00> : vector<9x512xf32>
    %8 = tpu.matmul %2, %1, %cst {dimension_numbers = #tpu.dot_dimension_numbers<[1], [0], [0], [1], [0, 0, 1, 1], [], []>} : vector<9x4xf32>, vector<4x512xf32>, vector<9x512xf32> -> vector<9x512xf32>
    %9 = vector.broadcast %3 : vector<9x1xf32> to vector<9x512xf32>
    %10 = arith.addf %8, %9 : vector<9x512xf32>
    %11 = arith.negf %10 : vector<9x512xf32>
    %12 = math.exp %11 : vector<9x512xf32>
    %cst_3 = arith.constant 1.000000e+00 : f32
    %13 = vector.broadcast %cst_3 : f32 to vector<9x512xf32>
    %14 = arith.addf %13, %12 : vector<9x512xf32>
    %15 = arith.divf %13, %14 : vector<9x512xf32>
    %cst_4 = arith.constant dense<0.000000e+00> : vector<6x512xf32>
    %16 = tpu.matmul %4, %15, %cst_4 {dimension_numbers = #tpu.dot_dimension_numbers<[1], [0], [0], [1], [0, 0, 1, 1], [], []>} : vector<6x9xf32>, vector<9x512xf32>, vector<6x512xf32> -> vector<6x512xf32>
    %17 = vector.broadcast %5 : vector<6x1xf32> to vector<6x512xf32>
    %18 = arith.addf %16, %17 : vector<6x512xf32>
    %19 = arith.negf %18 : vector<6x512xf32>
    %20 = math.exp %19 : vector<6x512xf32>
    %cst_5 = arith.constant 1.000000e+00 : f32
    %21 = vector.broadcast %cst_5 : f32 to vector<6x512xf32>
    %22 = arith.addf %21, %20 : vector<6x512xf32>
    %23 = arith.divf %21, %22 : vector<6x512xf32>
    %cst_6 = arith.constant dense<0.000000e+00> : vector<1x512xf32>
    %24 = tpu.matmul %6, %23, %cst_6 {dimension_numbers = #tpu.dot_dimension_numbers<[1], [0], [0], [1], [0, 0, 1, 1], [], []>} : vector<1x6xf32>, vector<6x512xf32>, vector<1x512xf32> -> vector<1x512xf32>
    %25 = vector.broadcast %7 : vector<1x1xf32> to vector<1x512xf32>
    %26 = arith.addf %24, %25 : vector<1x512xf32>
    %27 = arith.negf %26 : vector<1x512xf32>
    %28 = math.exp %27 : vector<1x512xf32>
    %cst_7 = arith.constant 1.000000e+00 : f32
    %29 = vector.broadcast %cst_7 : f32 to vector<1x512xf32>
    %30 = arith.addf %29, %28 : vector<1x512xf32>
    %31 = arith.divf %29, %30 : vector<1x512xf32>
    %c0_8 = arith.constant 0 : index
    %c0_9 = arith.constant 0 : index
    %32 = vector.load %arg3[%c0_8, %c0_9] : memref<1x512xf32, #tpu.memory_space<vmem>>, vector<1x512xf32>
    tpu.vector_store %arg3[%c0_8, %c0_9], %31 {strides = array<i32>} : memref<1x512xf32, #tpu.memory_space<vmem>>, vector<1x512xf32>,
    return
  }
  func.func @transform_0(%arg0: i32) -> (i32, i32) {
    %c0_i32 = arith.constant 0 : i32
    %c0_i32_0 = arith.constant 0 : i32
    %c0_i32_1 = arith.constant 0 : i32
    return %c0_i32, %c0_i32_0 : i32, i32
  }
  func.func @transform_1(%arg0: i32) -> (i32, i32) {
    %c0_i32 = arith.constant 0 : i32
    %c0_i32_0 = arith.constant 0 : i32
    return %c0_i32, %arg0 : i32, i32
  }
  func.func @transform_2(%arg0: i32) -> (i32, i32) {
    %c0_i32 = arith.constant 0 : i32
    %c0_i32_0 = arith.constant 0 : i32
    return %c0_i32, %arg0 : i32, i32
  }
}

</mosaic_0001>

<llo_original>
// kernel: dqnetwork_forward.1
$region0: #{dqnetwork_forward.1}
  #allocation0 [shape = 'u32[]', space=smem, size = 0x4, offset = 0x4, fixed_abs, tag = 'smem constant byte address 0x4 - core index']
  #allocation1 [shape = 'u32[72,128]{1,0:T(1,128)}', space=vmem, size = 0x9000, scoped, tag = 'internal scratch']
  %s0 = inlined_call_operand.vmem [shape: f32[9,22], index: 0, kind: input, shape index: {}]
  %s1 = inlined_call_operand.vmem [shape: f32[4,2048], index: 1, kind: input, shape index: {}]
  %s2 = inlined_call_operand.vmem [shape: f32[1,2048], index: 2, kind: output, shape index: {}]
  %s3 = sld [smem:[#allocation0]]
  $region41: #{dqnetwork_forward.1} parent=0
    _
  %s5 = ssub.s32 1, %s3
  %s6 = scalar_select 0, %s5, %s3
  loop: start=0, step=1, limit=6
  $region2: #{dqnetwork_forward.1} parent=0 // loop_pre_header
    _
  $region3: #{dqnetwork_forward.1} parent=0 // loop_header
    %s8 = sphi 0, %s12
    %p9 = scmp.ge.s32.totalorder %s8, 6
    %s16 = sphi 0, %s16
    %s18 = sphi 0, %s16
    %s19 = sphi 0, %s18
    %s33 = sphi 0, %s19
    %s39 = sphi 0, %s41
    %s42 = sphi 0, %s39
    %s43 = sphi 0, %s42
    %s59 = sphi 0, %s43
    %s65 = sphi 0, %s67
    %s68 = sphi 0, %s65
    %s69 = sphi 0, %s68
    %s85 = sphi 0, %s69
  $region4: #{dqnetwork_forward.1} parent=0 // loop_header_branch
    %11 = sbr.rel (%p9) target = $region8
  $region5: #{dqnetwork_forward.1} parent=0 // loop_body
    %s13 = ssub.s32 %s8, 1
    %s14 = ssub.s32 %s8, 2
    %s15 = sadd.s32 %s8, 1
    %s17 = sadd.s32 %s16, 1
    %p20 = scmp.eq.s32.totalorder %s8, 3
    %p21 = scmp.ne.s32.totalorder %s16, %s18
    %p22 = scmp.eq.s32.totalorder %s8, 0
    %p23 = por %p21, %p22
    %p24 = scmp.ne.s32.totalorder %s16, %s18
    %p25 = scmp.eq.s32.totalorder %s13, 3
    %p26 = por %p24, %p25
    %p27 = scmp.ne.s32.totalorder %s18, %s19
    %p28 = scmp.eq.s32.totalorder %s13, 0
    %p29 = por %p27, %p28
    %p30 = scmp.ne.s32.totalorder %s18, %s19
    %p31 = scmp.eq.s32.totalorder %s14, 3
    %p32 = por %p30, %p31
    %p34 = scmp.ne.s32.totalorder %s19, %s33
    %p35 = scmp.eq.s32.totalorder %s14, 0
    %p36 = por %p34, %p35
    %s37 = ssub.s32 %s8, %s15
    %p38 = scmp.eq.s32.totalorder %s37, 0
    %s40 = sadd.s32 %s39, 1
    %s41 = scalar_select %p38, %s39, %s40
    %p44 = pneg %p38
    %p45 = scmp.eq.s32.totalorder %s8, 3
    %p46 = por %p44, %p45
    %p47 = scmp.ne.s32.totalorder %s39, %s42
    %p48 = scmp.eq.s32.totalorder %s8, 0
    %p49 = por %p47, %p48
    %p50 = scmp.ne.s32.totalorder %s39, %s42
    %p51 = scmp.eq.s32.totalorder %s13, 3
    %p52 = por %p50, %p51
    %p53 = scmp.ne.s32.totalorder %s42, %s43
    %p54 = scmp.eq.s32.totalorder %s13, 0
    %p55 = por %p53, %p54
    %p56 = scmp.ne.s32.totalorder %s42, %s43
    %p57 = scmp.eq.s32.totalorder %s14, 3
    %p58 = por %p56, %p57
    %p60 = scmp.ne.s32.totalorder %s43, %s59
    %p61 = scmp.eq.s32.totalorder %s14, 0
    %p62 = por %p60, %p61
    %s63 = ssub.s32 %s8, %s15
    %p64 = scmp.eq.s32.totalorder %s63, 0
    %s66 = sadd.s32 %s65, 1
    %s67 = scalar_select %p64, %s65, %s66
    %p70 = pneg %p64
    %p71 = scmp.eq.s32.totalorder %s8, 3
    %p72 = por %p70, %p71
    %p73 = scmp.ne.s32.totalorder %s65, %s68
    %p74 = scmp.eq.s32.totalorder %s8, 0
    %p75 = por %p73, %p74
    %p76 = scmp.ne.s32.totalorder %s65, %s68
    %p77 = scmp.eq.s32.totalorder %s13, 3
    %p78 = por %p76, %p77
    %p79 = scmp.ne.s32.totalorder %s68, %s69
    %p80 = scmp.eq.s32.totalorder %s13, 0
    %p81 = por %p79, %p80
    %p82 = scmp.ne.s32.totalorder %s68, %s69
    %p83 = scmp.eq.s32.totalorder %s14, 3
    %p84 = por %p82, %p83
    %p86 = scmp.ne.s32.totalorder %s69, %s85
    %p87 = scmp.eq.s32.totalorder %s14, 0
    %p88 = por %p86, %p87
    %p89 = scmp.le.s32.totalorder 1, %s8
    %p90 = scmp.lt.s32.totalorder %s8, 5
    %p91 = pnand %p89, %p90
    %p92 = pneg %p91
    // Predicated region
    $region9: #{dqnetwork_forward.1} parent=5 // pred_check
      _
    $region10: #{dqnetwork_forward.1} parent=5 // pred_check_branch
      %94 = sbr.rel (%p91) target = $region12
    $region11: #{dqnetwork_forward.1} parent=5 // pred_region
      %s95 = ssub.s32 %s8, 1
      // Predicated region
      $region13: #{dqnetwork_forward.1} parent=11 // pred_check
        %p96 = pneg %p29
      $region14: #{dqnetwork_forward.1} parent=11 // pred_check_branch
        %98 = sbr.rel (%p96) target = $region16
      $region15: #{dqnetwork_forward.1} parent=11 // pred_region
        _
      $region16: #{dqnetwork_forward.1} parent=11 // pred_fallthru
        _
    $region12: #{dqnetwork_forward.1} parent=5 // pred_fallthru
      _
    %p99 = scmp.lt.s32.totalorder %s8, 4
    // Predicated region
    $region17: #{dqnetwork_forward.1} parent=5 // pred_check
      %p100 = pneg %p99
    $region18: #{dqnetwork_forward.1} parent=5 // pred_check_branch
      %102 = sbr.rel (%p100) target = $region20
    $region19: #{dqnetwork_forward.1} parent=5 // pred_region
      // Predicated region
      $region21: #{dqnetwork_forward.1} parent=19 // pred_check
        %p103 = pneg %p49
      $region22: #{dqnetwork_forward.1} parent=19 // pred_check_branch
        %105 = sbr.rel (%p103) target = $region24
      $region23: #{dqnetwork_forward.1} parent=19 // pred_region
        %s106 = smul.u32 4, %s8
        %p107 = scmp.lt.s32.totalorder %s106, 15
        %s108 = scalar_select %p107, %s106, 15
        %s109 = smul.addr %s108, 4
        %s110 = scalar_lea.vmem %s1, %s109
        %s111 = smul.u32 4, %s8
      $region24: #{dqnetwork_forward.1} parent=19 // pred_fallthru
        _
    $region20: #{dqnetwork_forward.1} parent=5 // pred_fallthru
      _
    %p112 = scmp.le.s32.totalorder 1, %s8
    %p113 = scmp.lt.s32.totalorder %s8, 5
    %p114 = pnand %p112, %p113
    %p115 = pneg %p114
    // Predicated region
    $region25: #{dqnetwork_forward.1} parent=5 // pred_check
      _
    $region26: #{dqnetwork_forward.1} parent=5 // pred_check_branch
      %117 = sbr.rel (%p114) target = $region28
    $region27: #{dqnetwork_forward.1} parent=5 // pred_region
      %s118 = ssub.s32 %s8, 1
      %p119 = pneg %p29
      %p120 = pneg %p26
      %s121 = smul.u32 4, %s13
      %p122 = scmp.lt.s32.totalorder %s121, 15
      %s123 = scalar_select %p122, %s121, 15
      %s124 = smul.addr %s123, 4
      %s125 = scalar_lea.vmem %s1, %s124
      %p126 = pneg %p55
      %p127 = pneg %p52
      %p128 = pneg %p81
      %p129 = pneg %p78
      %s130 = smul.u32 4, %s13
      %p131 = scmp.lt.s32.totalorder %s130, 15
      %s132 = scalar_select %p131, %s130, 15
      %s133 = scalar_lea.vmem %s2, %s132
      %s134 = smul.u32 4, %s13
      %p135 = scmp.lt.s32.totalorder %s134, 15
      %s136 = scalar_select %p135, %s134, 15
      %s137 = smul.addr %s136, 4
      %s138 = scalar_lea.vmem %s1, %s137
      %s139 = smul.u32 4, %s13
      %s140 = smul.u32 4, %s13
      %p141 = scmp.lt.s32.totalorder %s140, 15
      %s142 = scalar_select %p141, %s140, 15
      %s143 = scalar_lea.vmem %s2, %s142
      %s144 = smul.u32 4, %s13
      %v145 = vld [vmem:[%s0] sm:$0xff]
      %v146 = vld [vmem:[%s0 + $0x8] sm:$0x1]
      %v147 = vld [vmem:[%s138] sm:$0xff]
      %v148 = vld [vmem:[%s138 + $0x8] sm:$0xff]
      %150 = vset.pattern.permute.xlu0 4
      %151 = vperm.xlu0 %150, %v145
      %v152 = vpop.permute.xlu0 %151
      %155 = vset.pattern.permute.xlu0 4
      %156 = vperm.xlu0 %155, %v146
      %v157 = vpop.permute.xlu0 %156
      %161 = vst [vmem:[#allocation1] ss:$2 sm:$0xff] %v147
      %s162 = scalar_lea.vmem [#allocation1], 16
      %163 = vst [vmem:[%s162] ss:$2 sm:$0xff] %v148
      %v164 = vld.sshfl [vmem:[#allocation1] sm:$0xff pattern:$0x75316420]
      %v165 = vld.sshfl [vmem:[#allocation1 + $0x8] sm:$0xff pattern:$0x75316420]
      %v166 = vld.sshfl [vmem:[#allocation1 + $0x10] sm:$0xff pattern:$0x75316420]
      %v167 = vld.sshfl [vmem:[#allocation1 + $0x18] sm:$0xff pattern:$0x75316420]
      %vm168 = vcmask 31744
      %v169 = vsel %vm168, %v145, 0
      %v171 = vsel %vm168, %v146, 0
      %vm173 = vcmask 1043456
      %v174 = vsel %vm173, %v164, 0
      %v176 = vsel %vm173, %v165, 0
      %v178 = vsel %vm173, %v166, 0
      %v180 = vsel %vm173, %v167, 0
      %182 = vmatpush.msra.mxu0 0.0
      %183 = vmatpush.msra.mxu0 0.0
      %184 = vmatpush.msra.mxu0 0.0
      %185 = vmatpush.msra.mxu0 0.0
      %186 = vmatpush.msra.mxu0 0.0
      %187 = vmatpush.msra.mxu0 0.0
      %188 = vmatpush.msra.mxu0 0.0
      %189 = vmatpush.msra.mxu0 0.0
      %190 = vmatpush.msra.mxu0 0.0
      %191 = vmatpush.msra.mxu0 0.0
      %192 = vmatpush.msra.mxu0 0.0
      %193 = vmatpush.msra.mxu0 0.0
      %194 = vmatpush.msra.mxu0 0.0
      %195 = vmatpush.msra.mxu0 0.0
      %196 = vmatpush.msra.mxu0 0.0
      %197 = vmatpush.msra.mxu0 %v174
      %198 = vmatmul.f32.gmra.mxu0 %v169
      %v199 = vpop.f32.mrf.mxu0
      %v200 = vadd.f32 %v152, %v199
      %201 = vmatmul.f32.gmra.mxu0 %v171
      %v202 = vpop.f32.mrf.mxu0
      %v203 = vadd.f32 %v157, %v202
      %204 = vdwg.mxu0
      %205 = vmatpush.msra.mxu0 0.0
      %206 = vmatpush.msra.mxu0 0.0
      %207 = vmatpush.msra.mxu0 0.0
      %208 = vmatpush.msra.mxu0 0.0
      %209 = vmatpush.msra.mxu0 0.0
      %210 = vmatpush.msra.mxu0 0.0
      %211 = vmatpush.msra.mxu0 0.0
      %212 = vmatpush.msra.mxu0 0.0
      %213 = vmatpush.msra.mxu0 0.0
      %214 = vmatpush.msra.mxu0 0.0
      %215 = vmatpush.msra.mxu0 0.0
      %216 = vmatpush.msra.mxu0 0.0
      %217 = vmatpush.msra.mxu0 0.0
      %218 = vmatpush.msra.mxu0 0.0
      %219 = vmatpush.msra.mxu0 0.0
      %220 = vmatpush.msra.mxu0 %v176
      %221 = vmatmul.f32.gmra.mxu0 %v169
      %v222 = vpop.f32.mrf.mxu0
      %v223 = vadd.f32 %v152, %v222
      %224 = vmatmul.f32.gmra.mxu0 %v171
      %v225 = vpop.f32.mrf.mxu0
      %v226 = vadd.f32 %v157, %v225
      %227 = vdwg.mxu0
      %228 = vmatpush.msra.mxu0 0.0
      %229 = vmatpush.msra.mxu0 0.0
      %230 = vmatpush.msra.mxu0 0.0
      %231 = vmatpush.msra.mxu0 0.0
      %232 = vmatpush.msra.mxu0 0.0
      %233 = vmatpush.msra.mxu0 0.0
      %234 = vmatpush.msra.mxu0 0.0
      %235 = vmatpush.msra.mxu0 0.0
      %236 = vmatpush.msra.mxu0 0.0
      %237 = vmatpush.msra.mxu0 0.0
      %238 = vmatpush.msra.mxu0 0.0
      %239 = vmatpush.msra.mxu0 0.0
      %240 = vmatpush.msra.mxu0 0.0
      %241 = vmatpush.msra.mxu0 0.0
      %242 = vmatpush.msra.mxu0 0.0
      %243 = vmatpush.msra.mxu0 %v178
      %244 = vmatmul.f32.gmra.mxu0 %v169
      %v245 = vpop.f32.mrf.mxu0
      %v246 = vadd.f32 %v152, %v245
      %247 = vmatmul.f32.gmra.mxu0 %v171
      %v248 = vpop.f32.mrf.mxu0
      %v249 = vadd.f32 %v157, %v248
      %250 = vdwg.mxu0
      %251 = vmatpush.msra.mxu0 0.0
      %252 = vmatpush.msra.mxu0 0.0
      %253 = vmatpush.msra.mxu0 0.0
      %254 = vmatpush.msra.mxu0 0.0
      %255 = vmatpush.msra.mxu0 0.0
      %256 = vmatpush.msra.mxu0 0.0
      %257 = vmatpush.msra.mxu0 0.0
      %258 = vmatpush.msra.mxu0 0.0
      %259 = vmatpush.msra.mxu0 0.0
      %260 = vmatpush.msra.mxu0 0.0
      %261 = vmatpush.msra.mxu0 0.0
      %262 = vmatpush.msra.mxu0 0.0
      %263 = vmatpush.msra.mxu0 0.0
      %264 = vmatpush.msra.mxu0 0.0
      %265 = vmatpush.msra.mxu0 0.0
      %266 = vmatpush.msra.mxu0 %v180
      %267 = vmatmul.f32.gmra.mxu0 %v169
      %v268 = vpop.f32.mrf.mxu0
      %v269 = vadd.f32 %v152, %v268
      %270 = vmatmul.f32.gmra.mxu0 %v171
      %v271 = vpop.f32.mrf.mxu0
      %v272 = vadd.f32 %v157, %v271
      %273 = vdwg.mxu0
      %v274 = vxor.u32 %v200, 2147483648
      %v275 = vxor.u32 %v223, 2147483648
      %v276 = vxor.u32 %v246, 2147483648
      %v277 = vxor.u32 %v269, 2147483648
      %v278 = vxor.u32 %v203, 2147483648
      %v279 = vxor.u32 %v226, 2147483648
      %v280 = vxor.u32 %v249, 2147483648
      %v281 = vxor.u32 %v272, 2147483648
      %v282 = vmul.f32 %v274, 1.442695
      %v283 = vpow.pop %v282
      %v284 = vmul.f32 %v275, 1.442695
      %v285 = vpow.pop %v284
      %v286 = vmul.f32 %v276, 1.442695
      %v287 = vpow.pop %v286
      %v288 = vmul.f32 %v277, 1.442695
      %v289 = vpow.pop %v288
      %v290 = vmul.f32 %v278, 1.442695
      %v291 = vpow.pop %v290
      %v292 = vmul.f32 %v279, 1.442695
      %v293 = vpow.pop %v292
      %v294 = vmul.f32 %v280, 1.442695
      %v295 = vpow.pop %v294
      %v296 = vmul.f32 %v281, 1.442695
      %v297 = vpow.pop %v296
      %v298 = vadd.f32 %v283, 1.0
      %v299 = vadd.f32 %v285, 1.0
      %v300 = vadd.f32 %v287, 1.0
      %v301 = vadd.f32 %v289, 1.0
      %v302 = vadd.f32 %v291, 1.0
      %v303 = vadd.f32 %v293, 1.0
      %v304 = vadd.f32 %v295, 1.0
      %v305 = vadd.f32 %v297, 1.0
      %v306 = vrcp.pop %v298
      %v307 = vmul.f32 %v298, %v306
      %v308 = vsub.f32 1.0, %v307
      %v309 = vmul.f32 %v306, %v308
      %v310 = vadd.f32 %v306, %v309
      %vm311 = vweird.f32 %v298
      %vm312 = vweird.f32 %v306
      %vm313 = vmor %vm311, %vm312
      %v314 = vsel %vm313, %v306, %v310
      %v315 = vand.u32 2147483647, %v298
      %vm316 = vcmp.eq.f32.partialorder %v315, 8.507059e+37
      %v317 = vand.u32 %v298, 2147483648
      %v318 = vor.u32 1.1754944e-38, %v317
      %v319 = vsel %vm316, %v318, %v314
      %v320 = vmul.f32 1.0, %v319
      %v321 = vrcp.pop %v299
      %v322 = vmul.f32 %v299, %v321
      %v323 = vsub.f32 1.0, %v322
      %v324 = vmul.f32 %v321, %v323
      %v325 = vadd.f32 %v321, %v324
      %vm326 = vweird.f32 %v299
      %vm327 = vweird.f32 %v321
      %vm328 = vmor %vm326, %vm327
      %v329 = vsel %vm328, %v321, %v325
      %v330 = vand.u32 2147483647, %v299
      %vm331 = vcmp.eq.f32.partialorder %v330, 8.507059e+37
      %v332 = vand.u32 %v299, 2147483648
      %v333 = vor.u32 1.1754944e-38, %v332
      %v334 = vsel %vm331, %v333, %v329
      %v335 = vmul.f32 1.0, %v334
      %v336 = vrcp.pop %v300
      %v337 = vmul.f32 %v300, %v336
      %v338 = vsub.f32 1.0, %v337
      %v339 = vmul.f32 %v336, %v338
      %v340 = vadd.f32 %v336, %v339
      %vm341 = vweird.f32 %v300
      %vm342 = vweird.f32 %v336
      %vm343 = vmor %vm341, %vm342
      %v344 = vsel %vm343, %v336, %v340
      %v345 = vand.u32 2147483647, %v300
      %vm346 = vcmp.eq.f32.partialorder %v345, 8.507059e+37
      %v347 = vand.u32 %v300, 2147483648
      %v348 = vor.u32 1.1754944e-38, %v347
      %v349 = vsel %vm346, %v348, %v344
      %v350 = vmul.f32 1.0, %v349
      %v351 = vrcp.pop %v301
      %v352 = vmul.f32 %v301, %v351
      %v353 = vsub.f32 1.0, %v352
      %v354 = vmul.f32 %v351, %v353
      %v355 = vadd.f32 %v351, %v354
      %vm356 = vweird.f32 %v301
      %vm357 = vweird.f32 %v351
      %vm358 = vmor %vm356, %vm357
      %v359 = vsel %vm358, %v351, %v355
      %v360 = vand.u32 2147483647, %v301
      %vm361 = vcmp.eq.f32.partialorder %v360, 8.507059e+37
      %v362 = vand.u32 %v301, 2147483648
      %v363 = vor.u32 1.1754944e-38, %v362
      %v364 = vsel %vm361, %v363, %v359
      %v365 = vmul.f32 1.0, %v364
      %v366 = vrcp.pop %v302
      %v367 = vmul.f32 %v302, %v366
      %v368 = vsub.f32 1.0, %v367
      %v369 = vmul.f32 %v366, %v368
      %v370 = vadd.f32 %v366, %v369
      %vm371 = vweird.f32 %v302
      %vm372 = vweird.f32 %v366
      %vm373 = vmor %vm371, %vm372
      %v374 = vsel %vm373, %v366, %v370
      %v375 = vand.u32 2147483647, %v302
      %vm376 = vcmp.eq.f32.partialorder %v375, 8.507059e+37
      %v377 = vand.u32 %v302, 2147483648
      %v378 = vor.u32 1.1754944e-38, %v377
      %v379 = vsel %vm376, %v378, %v374
      %v380 = vmul.f32 1.0, %v379
      %v381 = vrcp.pop %v303
      %v382 = vmul.f32 %v303, %v381
      %v383 = vsub.f32 1.0, %v382
      %v384 = vmul.f32 %v381, %v383
      %v385 = vadd.f32 %v381, %v384
      %vm386 = vweird.f32 %v303
      %vm387 = vweird.f32 %v381
      %vm388 = vmor %vm386, %vm387
      %v389 = vsel %vm388, %v381, %v385
      %v390 = vand.u32 2147483647, %v303
      %vm391 = vcmp.eq.f32.partialorder %v390, 8.507059e+37
      %v392 = vand.u32 %v303, 2147483648
      %v393 = vor.u32 1.1754944e-38, %v392
      %v394 = vsel %vm391, %v393, %v389
      %v395 = vmul.f32 1.0, %v394
      %v396 = vrcp.pop %v304
      %v397 = vmul.f32 %v304, %v396
      %v398 = vsub.f32 1.0, %v397
      %v399 = vmul.f32 %v396, %v398
      %v400 = vadd.f32 %v396, %v399
      %vm401 = vweird.f32 %v304
      %vm402 = vweird.f32 %v396
      %vm403 = vmor %vm401, %vm402
      %v404 = vsel %vm403, %v396, %v400
      %v405 = vand.u32 2147483647, %v304
      %vm406 = vcmp.eq.f32.partialorder %v405, 8.507059e+37
      %v407 = vand.u32 %v304, 2147483648
      %v408 = vor.u32 1.1754944e-38, %v407
      %v409 = vsel %vm406, %v408, %v404
      %v410 = vmul.f32 1.0, %v409
      %v411 = vrcp.pop %v305
      %v412 = vmul.f32 %v305, %v411
      %v413 = vsub.f32 1.0, %v412
      %v414 = vmul.f32 %v411, %v413
      %v415 = vadd.f32 %v411, %v414
      %vm416 = vweird.f32 %v305
      %vm417 = vweird.f32 %v411
      %vm418 = vmor %vm416, %vm417
      %v419 = vsel %vm418, %v411, %v415
      %v420 = vand.u32 2147483647, %v305
      %vm421 = vcmp.eq.f32.partialorder %v420, 8.507059e+37
      %v422 = vand.u32 %v305, 2147483648
      %v423 = vor.u32 1.1754944e-38, %v422
      %v424 = vsel %vm421, %v423, %v419
      %v425 = vmul.f32 1.0, %v424
      %426 = vset.pattern.permute.xlu0 14
      %427 = vperm.xlu0 %426, %v145
      %v428 = vpop.permute.xlu0 %427
      %430 = vrot.lane.b32.xlu0 %v145, 123
      %v431 = vpop.permute.xlu0 %430
      %vm432 = vcmask 72704
      %v433 = vsel %vm432, %v431, 0
      %vm435 = vcmask 1040384
      %v437 = vsel %vm435, %v380, 0
      %v440 = vsel %vm435, %v395, 0
      %v443 = vsel %vm435, %v410, 0
      %v446 = vsel %vm435, %v425, 0
      %448 = vmatpush.msra.mxu0 0.0
      %449 = vmatpush.msra.mxu0 0.0
      %450 = vmatpush.msra.mxu0 0.0
      %451 = vmatpush.msra.mxu0 0.0
      %452 = vmatpush.msra.mxu0 0.0
      %453 = vmatpush.msra.mxu0 0.0
      %454 = vmatpush.msra.mxu0 0.0
      %455 = vmatpush.msra.mxu0 0.0
      %456 = vmatpush.msra.mxu0 0.0
      %457 = vmatpush.msra.mxu0 0.0
      %458 = vmatpush.msra.mxu0 0.0
      %459 = vmatpush.msra.mxu0 0.0
      %460 = vmatpush.msra.mxu0 0.0
      %461 = vmatpush.msra.mxu0 0.0
      %462 = vmatpush.msra.mxu0 %v437
      %463 = vmatpush.msra.mxu0 %v320
      %464 = vmatmul.f32.gmra.mxu0 %v433
      %v465 = vpop.f32.mrf.mxu0
      %v466 = vadd.f32 %v428, %v465
      %467 = vdwg.mxu0
      %468 = vmatpush.msra.mxu0 0.0
      %469 = vmatpush.msra.mxu0 0.0
      %470 = vmatpush.msra.mxu0 0.0
      %471 = vmatpush.msra.mxu0 0.0
      %472 = vmatpush.msra.mxu0 0.0
      %473 = vmatpush.msra.mxu0 0.0
      %474 = vmatpush.msra.mxu0 0.0
      %475 = vmatpush.msra.mxu0 0.0
      %476 = vmatpush.msra.mxu0 0.0
      %477 = vmatpush.msra.mxu0 0.0
      %478 = vmatpush.msra.mxu0 0.0
      %479 = vmatpush.msra.mxu0 0.0
      %480 = vmatpush.msra.mxu0 0.0
      %481 = vmatpush.msra.mxu0 0.0
      %482 = vmatpush.msra.mxu0 %v440
      %483 = vmatpush.msra.mxu0 %v335
      %484 = vmatmul.f32.gmra.mxu0 %v433
      %v485 = vpop.f32.mrf.mxu0
      %v486 = vadd.f32 %v428, %v485
      %487 = vdwg.mxu0
      %488 = vmatpush.msra.mxu0 0.0
      %489 = vmatpush.msra.mxu0 0.0
      %490 = vmatpush.msra.mxu0 0.0
      %491 = vmatpush.msra.mxu0 0.0
      %492 = vmatpush.msra.mxu0 0.0
      %493 = vmatpush.msra.mxu0 0.0
      %494 = vmatpush.msra.mxu0 0.0
      %495 = vmatpush.msra.mxu0 0.0
      %496 = vmatpush.msra.mxu0 0.0
      %497 = vmatpush.msra.mxu0 0.0
      %498 = vmatpush.msra.mxu0 0.0
      %499 = vmatpush.msra.mxu0 0.0
      %500 = vmatpush.msra.mxu0 0.0
      %501 = vmatpush.msra.mxu0 0.0
      %502 = vmatpush.msra.mxu0 %v443
      %503 = vmatpush.msra.mxu0 %v350
      %504 = vmatmul.f32.gmra.mxu0 %v433
      %v505 = vpop.f32.mrf.mxu0
      %v506 = vadd.f32 %v428, %v505
      %507 = vdwg.mxu0
      %508 = vmatpush.msra.mxu0 0.0
      %509 = vmatpush.msra.mxu0 0.0
      %510 = vmatpush.msra.mxu0 0.0
      %511 = vmatpush.msra.mxu0 0.0
      %512 = vmatpush.msra.mxu0 0.0
      %513 = vmatpush.msra.mxu0 0.0
      %514 = vmatpush.msra.mxu0 0.0
      %515 = vmatpush.msra.mxu0 0.0
      %516 = vmatpush.msra.mxu0 0.0
      %517 = vmatpush.msra.mxu0 0.0
      %518 = vmatpush.msra.mxu0 0.0
      %519 = vmatpush.msra.mxu0 0.0
      %520 = vmatpush.msra.mxu0 0.0
      %521 = vmatpush.msra.mxu0 0.0
      %522 = vmatpush.msra.mxu0 %v446
      %523 = vmatpush.msra.mxu0 %v365
      %524 = vmatmul.f32.gmra.mxu0 %v433
      %v525 = vpop.f32.mrf.mxu0
      %v526 = vadd.f32 %v428, %v525
      %527 = vdwg.mxu0
      %v528 = vxor.u32 %v466, 2147483648
      %v529 = vxor.u32 %v486, 2147483648
      %v530 = vxor.u32 %v506, 2147483648
      %v531 = vxor.u32 %v526, 2147483648
      %v532 = vmul.f32 %v528, 1.442695
      %v533 = vpow.pop %v532
      %v534 = vmul.f32 %v529, 1.442695
      %v535 = vpow.pop %v534
      %v536 = vmul.f32 %v530, 1.442695
      %v537 = vpow.pop %v536
      %v538 = vmul.f32 %v531, 1.442695
      %v539 = vpow.pop %v538
      %v540 = vadd.f32 %v533, 1.0
      %v541 = vadd.f32 %v535, 1.0
      %v542 = vadd.f32 %v537, 1.0
      %v543 = vadd.f32 %v539, 1.0
      %v544 = vrcp.pop %v540
      %v545 = vmul.f32 %v540, %v544
      %v546 = vsub.f32 1.0, %v545
      %v547 = vmul.f32 %v544, %v546
      %v548 = vadd.f32 %v544, %v547
      %vm549 = vweird.f32 %v540
      %vm550 = vweird.f32 %v544
      %vm551 = vmor %vm549, %vm550
      %v552 = vsel %vm551, %v544, %v548
      %v553 = vand.u32 2147483647, %v540
      %vm554 = vcmp.eq.f32.partialorder %v553, 8.507059e+37
      %v555 = vand.u32 %v540, 2147483648
      %v556 = vor.u32 1.1754944e-38, %v555
      %v557 = vsel %vm554, %v556, %v552
      %v558 = vmul.f32 1.0, %v557
      %v559 = vrcp.pop %v541
      %v560 = vmul.f32 %v541, %v559
      %v561 = vsub.f32 1.0, %v560
      %v562 = vmul.f32 %v559, %v561
      %v563 = vadd.f32 %v559, %v562
      %vm564 = vweird.f32 %v541
      %vm565 = vweird.f32 %v559
      %vm566 = vmor %vm564, %vm565
      %v567 = vsel %vm566, %v559, %v563
      %v568 = vand.u32 2147483647, %v541
      %vm569 = vcmp.eq.f32.partialorder %v568, 8.507059e+37
      %v570 = vand.u32 %v541, 2147483648
      %v571 = vor.u32 1.1754944e-38, %v570
      %v572 = vsel %vm569, %v571, %v567
      %v573 = vmul.f32 1.0, %v572
      %v574 = vrcp.pop %v542
      %v575 = vmul.f32 %v542, %v574
      %v576 = vsub.f32 1.0, %v575
      %v577 = vmul.f32 %v574, %v576
      %v578 = vadd.f32 %v574, %v577
      %vm579 = vweird.f32 %v542
      %vm580 = vweird.f32 %v574
      %vm581 = vmor %vm579, %vm580
      %v582 = vsel %vm581, %v574, %v578
      %v583 = vand.u32 2147483647, %v542
      %vm584 = vcmp.eq.f32.partialorder %v583, 8.507059e+37
      %v585 = vand.u32 %v542, 2147483648
      %v586 = vor.u32 1.1754944e-38, %v585
      %v587 = vsel %vm584, %v586, %v582
      %v588 = vmul.f32 1.0, %v587
      %v589 = vrcp.pop %v543
      %v590 = vmul.f32 %v543, %v589
      %v591 = vsub.f32 1.0, %v590
      %v592 = vmul.f32 %v589, %v591
      %v593 = vadd.f32 %v589, %v592
      %vm594 = vweird.f32 %v543
      %vm595 = vweird.f32 %v589
      %vm596 = vmor %vm594, %vm595
      %v597 = vsel %vm596, %v589, %v593
      %v598 = vand.u32 2147483647, %v543
      %vm599 = vcmp.eq.f32.partialorder %v598, 8.507059e+37
      %v600 = vand.u32 %v543, 2147483648
      %v601 = vor.u32 1.1754944e-38, %v600
      %v602 = vsel %vm599, %v601, %v597
      %v603 = vmul.f32 1.0, %v602
      %604 = vset.pattern.permute.xlu0 21
      %605 = vperm.xlu0 %604, %v145
      %v606 = vpop.permute.xlu0 %605
      %608 = vrot.lane.b32.xlu0 %v145, 113
      %v609 = vpop.permute.xlu0 %608
      %vm610 = vcmask 48128
      %v611 = vsel %vm610, %v609, 0
      %vm613 = vcmask 1045504
      %v615 = vsel %vm613, %v558, 0
      %v618 = vsel %vm613, %v573, 0
      %v621 = vsel %vm613, %v588, 0
      %v624 = vsel %vm613, %v603, 0
      %626 = vmatpush.msra.mxu0 0.0
      %627 = vmatpush.msra.mxu0 0.0
      %628 = vmatpush.msra.mxu0 0.0
      %629 = vmatpush.msra.mxu0 0.0
      %630 = vmatpush.msra.mxu0 0.0
      %631 = vmatpush.msra.mxu0 0.0
      %632 = vmatpush.msra.mxu0 0.0
      %633 = vmatpush.msra.mxu0 0.0
      %634 = vmatpush.msra.mxu0 0.0
      %635 = vmatpush.msra.mxu0 0.0
      %636 = vmatpush.msra.mxu0 0.0
      %637 = vmatpush.msra.mxu0 0.0
      %638 = vmatpush.msra.mxu0 0.0
      %639 = vmatpush.msra.mxu0 0.0
      %640 = vmatpush.msra.mxu0 0.0
      %641 = vmatpush.msra.mxu0 %v615
      %642 = vmatmul.f32.gmra.mxu0 %v611
      %v643 = vpop.f32.mrf.mxu0
      %v644 = vadd.f32 %v606, %v643
      %645 = vdwg.mxu0
      %646 = vmatpush.msra.mxu0 0.0
      %647 = vmatpush.msra.mxu0 0.0
      %648 = vmatpush.msra.mxu0 0.0
      %649 = vmatpush.msra.mxu0 0.0
      %650 = vmatpush.msra.mxu0 0.0
      %651 = vmatpush.msra.mxu0 0.0
      %652 = vmatpush.msra.mxu0 0.0
      %653 = vmatpush.msra.mxu0 0.0
      %654 = vmatpush.msra.mxu0 0.0
      %655 = vmatpush.msra.mxu0 0.0
      %656 = vmatpush.msra.mxu0 0.0
      %657 = vmatpush.msra.mxu0 0.0
      %658 = vmatpush.msra.mxu0 0.0
      %659 = vmatpush.msra.mxu0 0.0
      %660 = vmatpush.msra.mxu0 0.0
      %661 = vmatpush.msra.mxu0 %v618
      %662 = vmatmul.f32.gmra.mxu0 %v611
      %v663 = vpop.f32.mrf.mxu0
      %v664 = vadd.f32 %v606, %v663
      %665 = vdwg.mxu0
      %666 = vmatpush.msra.mxu0 0.0
      %667 = vmatpush.msra.mxu0 0.0
      %668 = vmatpush.msra.mxu0 0.0
      %669 = vmatpush.msra.mxu0 0.0
      %670 = vmatpush.msra.mxu0 0.0
      %671 = vmatpush.msra.mxu0 0.0
      %672 = vmatpush.msra.mxu0 0.0
      %673 = vmatpush.msra.mxu0 0.0
      %674 = vmatpush.msra.mxu0 0.0
      %675 = vmatpush.msra.mxu0 0.0
      %676 = vmatpush.msra.mxu0 0.0
      %677 = vmatpush.msra.mxu0 0.0
      %678 = vmatpush.msra.mxu0 0.0
      %679 = vmatpush.msra.mxu0 0.0
      %680 = vmatpush.msra.mxu0 0.0
      %681 = vmatpush.msra.mxu0 %v621
      %682 = vmatmul.f32.gmra.mxu0 %v611
      %v683 = vpop.f32.mrf.mxu0
      %v684 = vadd.f32 %v606, %v683
      %685 = vdwg.mxu0
      %686 = vmatpush.msra.mxu0 0.0
      %687 = vmatpush.msra.mxu0 0.0
      %688 = vmatpush.msra.mxu0 0.0
      %689 = vmatpush.msra.mxu0 0.0
      %690 = vmatpush.msra.mxu0 0.0
      %691 = vmatpush.msra.mxu0 0.0
      %692 = vmatpush.msra.mxu0 0.0
      %693 = vmatpush.msra.mxu0 0.0
      %694 = vmatpush.msra.mxu0 0.0
      %695 = vmatpush.msra.mxu0 0.0
      %696 = vmatpush.msra.mxu0 0.0
      %697 = vmatpush.msra.mxu0 0.0
      %698 = vmatpush.msra.mxu0 0.0
      %699 = vmatpush.msra.mxu0 0.0
      %700 = vmatpush.msra.mxu0 0.0
      %701 = vmatpush.msra.mxu0 %v624
      %702 = vmatmul.f32.gmra.mxu0 %v611
      %v703 = vpop.f32.mrf.mxu0
      %v704 = vadd.f32 %v606, %v703
      %705 = vdwg.mxu0
      %v706 = vxor.u32 %v644, 2147483648
      %v707 = vxor.u32 %v664, 2147483648
      %v708 = vxor.u32 %v684, 2147483648
      %v709 = vxor.u32 %v704, 2147483648
      %v710 = vmul.f32 %v706, 1.442695
      %v711 = vpow.pop %v710
      %v712 = vmul.f32 %v707, 1.442695
      %v713 = vpow.pop %v712
      %v714 = vmul.f32 %v708, 1.442695
      %v715 = vpow.pop %v714
      %v716 = vmul.f32 %v709, 1.442695
      %v717 = vpow.pop %v716
      %v718 = vadd.f32 %v711, 1.0
      %v719 = vadd.f32 %v713, 1.0
      %v720 = vadd.f32 %v715, 1.0
      %v721 = vadd.f32 %v717, 1.0
      %v722 = vrcp.pop %v718
      %v723 = vmul.f32 %v718, %v722
      %v724 = vsub.f32 1.0, %v723
      %v725 = vmul.f32 %v722, %v724
      %v726 = vadd.f32 %v722, %v725
      %vm727 = vweird.f32 %v718
      %vm728 = vweird.f32 %v722
      %vm729 = vmor %vm727, %vm728
      %v730 = vsel %vm729, %v722, %v726
      %v731 = vand.u32 2147483647, %v718
      %vm732 = vcmp.eq.f32.partialorder %v731, 8.507059e+37
      %v733 = vand.u32 %v718, 2147483648
      %v734 = vor.u32 1.1754944e-38, %v733
      %v735 = vsel %vm732, %v734, %v730
      %v736 = vmul.f32 1.0, %v735
      %v737 = vrcp.pop %v719
      %v738 = vmul.f32 %v719, %v737
      %v739 = vsub.f32 1.0, %v738
      %v740 = vmul.f32 %v737, %v739
      %v741 = vadd.f32 %v737, %v740
      %vm742 = vweird.f32 %v719
      %vm743 = vweird.f32 %v737
      %vm744 = vmor %vm742, %vm743
      %v745 = vsel %vm744, %v737, %v741
      %v746 = vand.u32 2147483647, %v719
      %vm747 = vcmp.eq.f32.partialorder %v746, 8.507059e+37
      %v748 = vand.u32 %v719, 2147483648
      %v749 = vor.u32 1.1754944e-38, %v748
      %v750 = vsel %vm747, %v749, %v745
      %v751 = vmul.f32 1.0, %v750
      %v752 = vrcp.pop %v720
      %v753 = vmul.f32 %v720, %v752
      %v754 = vsub.f32 1.0, %v753
      %v755 = vmul.f32 %v752, %v754
      %v756 = vadd.f32 %v752, %v755
      %vm757 = vweird.f32 %v720
      %vm758 = vweird.f32 %v752
      %vm759 = vmor %vm757, %vm758
      %v760 = vsel %vm759, %v752, %v756
      %v761 = vand.u32 2147483647, %v720
      %vm762 = vcmp.eq.f32.partialorder %v761, 8.507059e+37
      %v763 = vand.u32 %v720, 2147483648
      %v764 = vor.u32 1.1754944e-38, %v763
      %v765 = vsel %vm762, %v764, %v760
      %v766 = vmul.f32 1.0, %v765
      %v767 = vrcp.pop %v721
      %v768 = vmul.f32 %v721, %v767
      %v769 = vsub.f32 1.0, %v768
      %v770 = vmul.f32 %v767, %v769
      %v771 = vadd.f32 %v767, %v770
      %vm772 = vweird.f32 %v721
      %vm773 = vweird.f32 %v767
      %vm774 = vmor %vm772, %vm773
      %v775 = vsel %vm774, %v767, %v771
      %v776 = vand.u32 2147483647, %v721
      %vm777 = vcmp.eq.f32.partialorder %v776, 8.507059e+37
      %v778 = vand.u32 %v721, 2147483648
      %v779 = vor.u32 1.1754944e-38, %v778
      %v780 = vsel %vm777, %v779, %v775
      %v781 = vmul.f32 1.0, %v780
      %v786 = vrot.slane %v751, 7
      %v787 = vrot.slane %v766, 6
      %v788 = vrot.slane %v781, 5
      %v789 = vsel %vm435, %v736, %v786
      %vm790 = vcmask 1042434
      %v791 = vsel %vm790, %v787, %v788
      %vm792 = vcmask 1041408
      %v793 = vsel %vm792, %v789, %v791
      %v795 = vlaneseq
      %vm796 = vcmp.ge.s32.totalorder %v795, 0
      %vm797 = vcmp.lt.s32.totalorder %v795, 512
      %vm798 = vmand %vm796, %vm797
      %799 = vst.msk [vmem:[%s143] sm:$0xf] %vm798, %v793
      %s800 = smul.u32 4, %s13
      %p801 = scmp.lt.s32.totalorder %s800, 15
      %s802 = scalar_select %p801, %s800, 15
      %s803 = scalar_lea.vmem %s2, %s802
      // Predicated region
      $region29: #{dqnetwork_forward.1} parent=27 // pred_check
        %p804 = pneg %p78
      $region30: #{dqnetwork_forward.1} parent=27 // pred_check_branch
        %806 = sbr.rel (%p804) target = $region32
      $region31: #{dqnetwork_forward.1} parent=27 // pred_region
        %s807 = smul.u32 4, %s13
      $region32: #{dqnetwork_forward.1} parent=27 // pred_fallthru
        _
    $region28: #{dqnetwork_forward.1} parent=5 // pred_fallthru
      _
    %p808 = scmp.le.s32.totalorder 2, %s8
    // Predicated region
    $region33: #{dqnetwork_forward.1} parent=5 // pred_check
      %p809 = pneg %p808
    $region34: #{dqnetwork_forward.1} parent=5 // pred_check_branch
      %811 = sbr.rel (%p809) target = $region36
    $region35: #{dqnetwork_forward.1} parent=5 // pred_region
      %s812 = ssub.s32 %s8, 2
      // Predicated region
      $region37: #{dqnetwork_forward.1} parent=35 // pred_check
        %p813 = pneg %p84
      $region38: #{dqnetwork_forward.1} parent=35 // pred_check_branch
        %815 = sbr.rel (%p813) target = $region40
      $region39: #{dqnetwork_forward.1} parent=35 // pred_region
        %s816 = smul.u32 4, %s14
        %p817 = scmp.lt.s32.totalorder %s816, 15
        %s818 = scalar_select %p817, %s816, 15
        %s819 = scalar_lea.vmem %s2, %s818
      $region40: #{dqnetwork_forward.1} parent=35 // pred_fallthru
        _
    $region36: #{dqnetwork_forward.1} parent=5 // pred_fallthru
      _
  $region6: #{dqnetwork_forward.1} parent=0 // loop_footer
    %s12 = sadd.s32 1, %s8
  $region7: #{dqnetwork_forward.1} parent=0 // loop_footer_branch
    %7 = sbr.rel target = $region3
  $region8: #{dqnetwork_forward.1} parent=0 // loop_exit
    _

</llo_original>
